<compile_context>
chip_gen: v5e
topology: v5e:2x2
jax: 0.10.0
libtpu: 0.0.40
codegen_flags: <defaults>
</compile_context>

<pallas_src>
import functools

import jax
import jax.numpy as jnp
from jax import lax
from jax.experimental import pallas as pl
from jax.experimental.pallas import tpu as pltpu


def _ranking_loss_kernel(tau, batch, q_ref, d_ref, lab_ref, out_ref,
                         qn_ref, expsum_ref, picked_ref):
    """Grid = (query tiles, doc tiles). Streams doc tiles with a bounded-score
    streaming softmax; writes per-query-row (lse - picked) on the last doc tile."""
    i = pl.program_id(0)                       # query-tile index ("parallel")
    j = pl.program_id(1)                       # doc-tile index   ("arbitrary")
    tq = q_ref.shape[0]
    td = d_ref.shape[0]

    # ---- per-query-tile init: normalize queries once, zero accumulators ----
    @pl.when(j == 0)
    def _init():
        q = q_ref[...].astype(jnp.float32)                         # (TQ, Dp)
        # F.normalize(q, dim=-1, p=2) == q / max(||q||, 1e-12);
        # rsqrt(max(sum_sq, 1e-24)) runs on the EUP slot, divides -> multiplies.
        q_scale = lax.rsqrt(
            jnp.maximum(jnp.sum(q * q, axis=-1, keepdims=True), 1e-24))
        # Fold tau into the query scale; bf16 operands -> full-rate MXU matmul.
        qn_ref[...] = (q * (q_scale * tau)).astype(jnp.bfloat16)
        expsum_ref[...] = jnp.zeros_like(expsum_ref)
        picked_ref[...] = jnp.zeros_like(picked_ref)

    # ---- streamed score block: (TQ, TD) = (tau * q_hat) @ d_hat^T ----------
    # Contraction on the embedding dim of both operands (no transpose of docs).
    scores = lax.dot_general(
        qn_ref[...], d_ref[...],
        dimension_numbers=(((1,), (1,)), ((), ())),
        preferred_element_type=jnp.float32,
    )                                                              # (TQ, TD) f32

    col = j * td + lax.broadcasted_iota(jnp.int32, scores.shape, 1)  # global col
    col_valid = col < batch                     # masks padded / partial doc tiles
    lab = lab_ref[...]                                             # (TQ, 1) int32

    # Bounded-score streaming logsumexp: scores in [-tau, tau] => no running max.
    expsum_ref[...] += jnp.sum(
        jnp.where(col_valid, jnp.exp(scores - tau), 0.0), axis=-1, keepdims=True)
    # Label-picked logit (labels always reference a valid global column < batch).
    picked_ref[...] += jnp.sum(
        jnp.where(col == lab, scores, 0.0), axis=-1, keepdims=True)

    # ---- finalize per query row on the last doc tile ------------------------
    @pl.when(j == pl.num_programs(1) - 1)
    def _finalize():
        lse = tau + jnp.log(expsum_ref[...])                       # (TQ, 1)
        per_row = lse - picked_ref[...]
        # Mask rows of a (possibly) partial last query tile (garbage VMEM rows).
        row = i * tq + lax.broadcasted_iota(jnp.int32, (tq, 1), 0)
        out_ref[...] = jnp.where(row < batch, per_row, 0.0)


def ranking_loss(query_vecs, doc_vecs, labels, tau: float = 20.0):
    """query_vecs: (B, D) float, doc_vecs: (B, D) float, labels: (B,) int."""
    B, D = query_vecs.shape
    labels_2d = labels.astype(jnp.int32).reshape(B, 1)

    # Pre-normalize the docs ONCE in the wrapper (one cheap XLA op) and cast to
    # bf16 (halves the streamed doc bytes, full-rate MXU operand).
    d32 = doc_vecs.astype(jnp.float32)
    dn = (d32 / jnp.maximum(
        jnp.linalg.norm(d32, axis=-1, keepdims=True), 1e-12)).astype(jnp.bfloat16)

    # Pad the embedding (lane) dim to a multiple of 128; zeros change neither
    # norms nor dot products.
    Dp = ((D + 127) // 128) * 128
    if Dp != D:
        query_p = jnp.pad(query_vecs, ((0, 0), (0, Dp - D)))
        dn = jnp.pad(dn, ((0, 0), (0, Dp - D)))
    else:
        query_p = query_vecs

    # Tile sizes: whole batch when small, otherwise MXU-friendly tiles.
    TQ = B if B <= 256 else 256
    TD = B if B <= 512 else 512
    nt_q = pl.cdiv(B, TQ)
    nt_d = pl.cdiv(B, TD)

    kernel = functools.partial(_ranking_loss_kernel, float(tau), int(B))

    cost = pl.CostEstimate(
        flops=2 * B * B * Dp,
        transcendentals=B * B + 2 * B,
        bytes_accessed=(B * Dp * jnp.dtype(query_p.dtype).itemsize   # queries
                        + B * Dp * 2                                  # bf16 docs
                        + B * 4 + B * 4),                             # labels+out
    )

    per_row = pl.pallas_call(
        kernel,
        out_shape=jax.ShapeDtypeStruct((B, 1), jnp.float32),
        grid=(nt_q, nt_d),
        in_specs=[
            pl.BlockSpec((TQ, Dp), lambda i, j: (i, 0)),   # query tile (const over j)
            pl.BlockSpec((TD, Dp), lambda i, j: (j, 0)),   # streamed doc tile
            pl.BlockSpec((TQ, 1), lambda i, j: (i, 0)),    # labels tile
        ],
        out_specs=pl.BlockSpec((TQ, 1), lambda i, j: (i, 0)),
        scratch_shapes=[
            pltpu.VMEM((TQ, Dp), jnp.bfloat16),            # cached tau * q_hat
            pltpu.VMEM((TQ, 1), jnp.float32),              # running exp-sum
            pltpu.VMEM((TQ, 1), jnp.float32),              # running picked logit
        ],
        compiler_params=pltpu.CompilerParams(
            dimension_semantics=("parallel", "arbitrary"),
            vmem_limit_bytes=48 << 20,
        ),
        cost_estimate=cost,
    )(query_p, dn, labels_2d)

    # Final reduction + mean in the wrapper (negligible; keeps the query-tile
    # axis truly parallel and avoids a cross-step scalar RMW chain).
    return jnp.sum(per_row[:, 0]) / B


def ranking_loss_ref(query_vecs, doc_vecs, labels, tau: float = 20.0):
    qn = query_vecs / jnp.maximum(
        jnp.linalg.norm(query_vecs, axis=-1, keepdims=True), 1e-12)
    dn = doc_vecs / jnp.maximum(
        jnp.linalg.norm(doc_vecs, axis=-1, keepdims=True), 1e-12)
    scores = jnp.einsum('qi,pi->qp', qn, dn) * tau
    logz = jax.nn.logsumexp(scores, axis=-1)
    picked = scores[jnp.arange(scores.shape[0]), labels]
    return jnp.mean(logz - picked)


if __name__ == "__main__":
    key = jax.random.PRNGKey(0)
    kq, kd = jax.random.split(key, 2)

    B, D = 8, 32  # small shapes consistent with (batch_size, embedding_dim)
    query_vecs = jax.random.normal(kq, (B, D), dtype=jnp.float32)
    doc_vecs = jax.random.normal(kd, (B, D), dtype=jnp.float32)
    # standard in-batch contrastive setup: label i pairs query i with doc i
    labels = jnp.arange(B, dtype=jnp.int32)

    loss = jax.block_until_ready(ranking_loss(query_vecs, doc_vecs, labels, tau=20.0))
    ref = jax.block_until_ready(ranking_loss_ref(query_vecs, doc_vecs, labels, tau=20.0))

    # bf16 matmul operands (full-rate MXU) introduce ~0.4% relative error on the
    # tau-scaled scores; loss-level error is well inside this tolerance.
    assert jnp.isfinite(loss), loss
    assert jnp.allclose(loss, ref, atol=5e-2, rtol=5e-2), (loss, ref)
    print("KERNEL_OK")
</pallas_src>

<mosaic_0001>
module attributes {stable_mosaic.version = 11 : i64} {
  func.func @_ranking_loss_kernel(%arg0: i32, %arg1: i32, %arg2: memref<8x128xf32, #tpu.memory_space<vmem>>, %arg3: memref<8x128xbf16, #tpu.memory_space<vmem>>, %arg4: memref<8x1xi32, #tpu.memory_space<vmem>>, %arg5: memref<8x1xf32, #tpu.memory_space<vmem>>, %arg6: memref<8x128xbf16, #tpu.memory_space<vmem>>, %arg7: memref<8x1xf32, #tpu.memory_space<vmem>>, %arg8: memref<8x1xf32, #tpu.memory_space<vmem>>) attributes {dimension_semantics = [#tpu.dimension_semantics<parallel>, #tpu.dimension_semantics<arbitrary>], iteration_bounds = array<i64: 1, 1>, scalar_prefetch = 0 : i64, scratch_operands = 3 : i64, tpu.core_type = #tpu.core_type<tc>, window_params = [{transform_indices = @transform_0, window_bounds = array<i64: 8, 128>}, {transform_indices = @transform_1, window_bounds = array<i64: 8, 128>}, {transform_indices = @transform_2, window_bounds = array<i64: 8, 1>}, {transform_indices = @transform_3, window_bounds = array<i64: 8, 1>}]} {
    %c0_i32 = arith.constant 0 : i32
    %0 = arith.cmpi eq, %arg1, %c0_i32 : i32
    %1 = arith.extui %0 : i1 to i32
    %c0_i32_0 = arith.constant 0 : i32
    %2 = arith.cmpi ne, %1, %c0_i32_0 : i32
    scf.if %2 {
      %c0_22 = arith.constant 0 : index
      %c0_23 = arith.constant 0 : index
      %35 = vector.load %arg2[%c0_22, %c0_23] : memref<8x128xf32, #tpu.memory_space<vmem>>, vector<8x128xf32>
      %36 = arith.mulf %35, %35 : vector<8x128xf32>
      %cst_24 = arith.constant dense<0.000000e+00> : vector<8xf32>
      %37 = vector.multi_reduction <add>, %36, %cst_24 [1] : vector<8x128xf32> to vector<8xf32>
      %38 = vector.shape_cast %37 : vector<8xf32> to vector<8x1xf32>
      %cst_25 = arith.constant 1.000000e-24 : f32
      %39 = vector.broadcast %cst_25 : f32 to vector<8x1xf32>
      %40 = arith.maximumf %38, %39 : vector<8x1xf32>
      %41 = math.rsqrt %40 : vector<8x1xf32>
      %cst_26 = arith.constant 2.000000e+01 : f32
      %42 = vector.broadcast %cst_26 : f32 to vector<8x1xf32>
      %43 = arith.mulf %41, %42 : vector<8x1xf32>
      %44 = vector.broadcast %43 : vector<8x1xf32> to vector<8x128xf32>
      %45 = arith.mulf %35, %44 : vector<8x128xf32>
      %46 = arith.truncf %45 : vector<8x128xf32> to vector<8x128xbf16>
      %c0_27 = arith.constant 0 : index
      %c0_28 = arith.constant 0 : index
      %47 = vector.load %arg6[%c0_27, %c0_28] : memref<8x128xbf16, #tpu.memory_space<vmem>>, vector<8x128xbf16>
      tpu.vector_store %arg6[%c0_27, %c0_28], %46 {strides = array<i32>} : memref<8x128xbf16, #tpu.memory_space<vmem>>, vector<8x128xbf16>,
      %cst_29 = arith.constant 0.000000e+00 : f32
      %48 = vector.broadcast %cst_29 : f32 to vector<8x1xf32>
      %c0_30 = arith.constant 0 : index
      %c0_31 = arith.constant 0 : index
      %49 = vector.load %arg7[%c0_30, %c0_31] : memref<8x1xf32, #tpu.memory_space<vmem>>, vector<8x1xf32>
      tpu.vector_store %arg7[%c0_30, %c0_31], %48 {strides = array<i32>} : memref<8x1xf32, #tpu.memory_space<vmem>>, vector<8x1xf32>,
      %cst_32 = arith.constant 0.000000e+00 : f32
      %50 = vector.broadcast %cst_32 : f32 to vector<8x1xf32>
      %c0_33 = arith.constant 0 : index
      %c0_34 = arith.constant 0 : index
      %51 = vector.load %arg8[%c0_33, %c0_34] : memref<8x1xf32, #tpu.memory_space<vmem>>, vector<8x1xf32>
      tpu.vector_store %arg8[%c0_33, %c0_34], %50 {strides = array<i32>} : memref<8x1xf32, #tpu.memory_space<vmem>>, vector<8x1xf32>,
    } else {
    }
    %c0 = arith.constant 0 : index
    %c0_1 = arith.constant 0 : index
    %3 = vector.load %arg6[%c0, %c0_1] : memref<8x128xbf16, #tpu.memory_space<vmem>>, vector<8x128xbf16>
    %c0_2 = arith.constant 0 : index
    %c0_3 = arith.constant 0 : index
    %4 = vector.load %arg3[%c0_2, %c0_3] : memref<8x128xbf16, #tpu.memory_space<vmem>>, vector<8x128xbf16>
    %cst = arith.constant dense<0.000000e+00> : vector<8x8xf32>
    %5 = tpu.matmul %3, %4, %cst {dimension_numbers = #tpu.dot_dimension_numbers<[1], [1], [0], [0], [0, 0, 1, 0], [], []>} : vector<8x128xbf16>, vector<8x128xbf16>, vector<8x8xf32> -> vector<8x8xf32>
    %c8_i32 = arith.constant 8 : i32
    %6 = arith.muli %arg1, %c8_i32 : i32
    %7 = tpu.iota {dimensions = array<i32: 1>} : vector<8x8xi32>
    %8 = vector.broadcast %6 : i32 to vector<8x8xi32>
    %9 = arith.addi %8, %7 : vector<8x8xi32>
    %c8_i32_4 = arith.constant 8 : i32
    %10 = vector.broadcast %c8_i32_4 : i32 to vector<8x8xi32>
    %11 = arith.cmpi slt, %9, %10 : vector<8x8xi32>
    %c0_5 = arith.constant 0 : index
    %c0_6 = arith.constant 0 : index
    %12 = vector.load %arg4[%c0_5, %c0_6] : memref<8x1xi32, #tpu.memory_space<vmem>>, vector<8x1xi32>
    %c0_7 = arith.constant 0 : index
    %c0_8 = arith.constant 0 : index
    %13 = vector.load %arg7[%c0_7, %c0_8] : memref<8x1xf32, #tpu.memory_space<vmem>>, vector<8x1xf32>
    %cst_9 = arith.constant 2.000000e+01 : f32
    %14 = vector.broadcast %cst_9 : f32 to vector<8x8xf32>
    %15 = arith.subf %5, %14 : vector<8x8xf32>
    %16 = math.exp %15 : vector<8x8xf32>
    %cst_10 = arith.constant 0.000000e+00 : f32
    %17 = vector.broadcast %cst_10 : f32 to vector<8x8xf32>
    %18 = arith.select %11, %16, %17 : vector<8x8xi1>, vector<8x8xf32>
    %cst_11 = arith.constant dense<0.000000e+00> : vector<8xf32>
    %19 = vector.multi_reduction <add>, %18, %cst_11 [1] : vector<8x8xf32> to vector<8xf32>
    %20 = vector.shape_cast %19 : vector<8xf32> to vector<8x1xf32>
    %21 = arith.addf %13, %20 : vector<8x1xf32>
    %c0_12 = arith.constant 0 : index
    %c0_13 = arith.constant 0 : index
    %22 = vector.load %arg7[%c0_12, %c0_13] : memref<8x1xf32, #tpu.memory_space<vmem>>, vector<8x1xf32>
    tpu.vector_store %arg7[%c0_12, %c0_13], %21 {strides = array<i32>} : memref<8x1xf32, #tpu.memory_space<vmem>>, vector<8x1xf32>,
    %c0_14 = arith.constant 0 : index
    %c0_15 = arith.constant 0 : index
    %23 = vector.load %arg8[%c0_14, %c0_15] : memref<8x1xf32, #tpu.memory_space<vmem>>, vector<8x1xf32>
    %24 = vector.broadcast %12 : vector<8x1xi32> to vector<8x8xi32>
    %25 = arith.cmpi eq, %9, %24 : vector<8x8xi32>
    %cst_16 = arith.constant 0.000000e+00 : f32
    %26 = vector.broadcast %cst_16 : f32 to vector<8x8xf32>
    %27 = arith.select %25, %5, %26 : vector<8x8xi1>, vector<8x8xf32>
    %cst_17 = arith.constant dense<0.000000e+00> : vector<8xf32>
    %28 = vector.multi_reduction <add>, %27, %cst_17 [1] : vector<8x8xf32> to vector<8xf32>
    %29 = vector.shape_cast %28 : vector<8xf32> to vector<8x1xf32>
    %30 = arith.addf %23, %29 : vector<8x1xf32>
    %c0_18 = arith.constant 0 : index
    %c0_19 = arith.constant 0 : index
    %31 = vector.load %arg8[%c0_18, %c0_19] : memref<8x1xf32, #tpu.memory_space<vmem>>, vector<8x1xf32>
    tpu.vector_store %arg8[%c0_18, %c0_19], %30 {strides = array<i32>} : memref<8x1xf32, #tpu.memory_space<vmem>>, vector<8x1xf32>,
    %c0_i32_20 = arith.constant 0 : i32
    %32 = arith.cmpi eq, %arg1, %c0_i32_20 : i32
    %33 = arith.extui %32 : i1 to i32
    %c0_i32_21 = arith.constant 0 : i32
    %34 = arith.cmpi ne, %33, %c0_i32_21 : i32
    scf.if %34 {
      %c0_22 = arith.constant 0 : index
      %c0_23 = arith.constant 0 : index
      %35 = vector.load %arg7[%c0_22, %c0_23] : memref<8x1xf32, #tpu.memory_space<vmem>>, vector<8x1xf32>
      %36 = math.log %35 : vector<8x1xf32>
      %cst_24 = arith.constant 2.000000e+01 : f32
      %37 = vector.broadcast %cst_24 : f32 to vector<8x1xf32>
      %38 = arith.addf %37, %36 : vector<8x1xf32>
      %c0_25 = arith.constant 0 : index
      %c0_26 = arith.constant 0 : index
      %39 = vector.load %arg8[%c0_25, %c0_26] : memref<8x1xf32, #tpu.memory_space<vmem>>, vector<8x1xf32>
      %40 = arith.subf %38, %39 : vector<8x1xf32>
      %c8_i32_27 = arith.constant 8 : i32
      %41 = arith.muli %arg0, %c8_i32_27 : i32
      %42 = tpu.iota {dimensions = array<i32: 0>} : vector<8x1xi32>
      %43 = vector.broadcast %41 : i32 to vector<8x1xi32>
      %44 = arith.addi %43, %42 : vector<8x1xi32>
      %c8_i32_28 = arith.constant 8 : i32
      %45 = vector.broadcast %c8_i32_28 : i32 to vector<8x1xi32>
      %46 = arith.cmpi slt, %44, %45 : vector<8x1xi32>
      %cst_29 = arith.constant 0.000000e+00 : f32
      %47 = vector.broadcast %cst_29 : f32 to vector<8x1xf32>
      %48 = arith.select %46, %40, %47 : vector<8x1xi1>, vector<8x1xf32>
      %c0_30 = arith.constant 0 : index
      %c0_31 = arith.constant 0 : index
      %49 = vector.load %arg5[%c0_30, %c0_31] : memref<8x1xf32, #tpu.memory_space<vmem>>, vector<8x1xf32>
      tpu.vector_store %arg5[%c0_30, %c0_31], %48 {strides = array<i32>} : memref<8x1xf32, #tpu.memory_space<vmem>>, vector<8x1xf32>,
    } else {
    }
    return
  }
  func.func @transform_0(%arg0: i32, %arg1: i32) -> (i32, i32) {
    %c0_i32 = arith.constant 0 : i32
    %c0_i32_0 = arith.constant 0 : i32
    return %arg0, %c0_i32 : i32, i32
  }
  func.func @transform_1(%arg0: i32, %arg1: i32) -> (i32, i32) {
    %c0_i32 = arith.constant 0 : i32
    %c0_i32_0 = arith.constant 0 : i32
    return %arg1, %c0_i32 : i32, i32
  }
  func.func @transform_2(%arg0: i32, %arg1: i32) -> (i32, i32) {
    %c0_i32 = arith.constant 0 : i32
    %c0_i32_0 = arith.constant 0 : i32
    return %arg0, %c0_i32 : i32, i32
  }
  func.func @transform_3(%arg0: i32, %arg1: i32) -> (i32, i32) {
    %c0_i32 = arith.constant 0 : i32
    %c0_i32_0 = arith.constant 0 : i32
    return %arg0, %c0_i32 : i32, i32
  }
}

</mosaic_0001>

<llo_original>
// kernel: tpu_custom_call.1
$region0: #{tpu_custom_call.1}
  #allocation0 [shape = 'u32[]', space=smem, size = 0x4, offset = 0x4, fixed_abs, tag = 'smem constant byte address 0x4 - core index']
  #allocation1 [shape = 'u32[72,128]{1,0:T(1,128)}', space=vmem, size = 0x9000, scoped, tag = 'internal scratch']
  #allocation2 [shape = 'bf16[8,128]{1,0:T(8,128)(2,1)}', space=vmem, size = 0x800, scoped, tag = 'scratch operand']
  #allocation3 [shape = 'f32[8,1]{1,0:T(8,128)}', space=vmem, size = 0x1000, scoped, tag = 'scratch operand']
  #allocation4 [shape = 'f32[8,1]{1,0:T(8,128)}', space=vmem, size = 0x1000, scoped, tag = 'scratch operand']
  %s0 = inlined_call_operand.vmem [shape: f32[8,128], index: 0, kind: input, shape index: {}]
  %s1 = inlined_call_operand.hbm [shape: bf16[8,128], index: 1, kind: input, shape index: {}]
  %s2 = inlined_call_operand.vmem [shape: s32[8,1], index: 2, kind: input, shape index: {}]
  %s3 = inlined_call_operand.vmem [shape: f32[8,1], index: 3, kind: output, shape index: {}]
  %s4 = sld [smem:[#allocation0]]
  $region34: #{tpu_custom_call.1} parent=0
    _
  %s6 = ssub.s32 1, %s4
  %s7 = scalar_select 0, %s6, %s4
  $region1: #{tpu_custom_call.1} parent=0
    #allocation5 [shape = 'u8[2048]{0}', space=vmem, size = 0x800, scoped, tag = 'input window, operand 1, single buffered']
    #allocation6 [shape = 's32[1]{0}', space=sflag, size = 0x4, scoped, tag = 'scoped memory for tpu_custom_call.1']
    %8 = vsyncpa [#allocation6], 0
    // Predicated region
    $region2: #{tpu_custom_call.1} parent=1 // pred_check
      _
    $region3: #{tpu_custom_call.1} parent=1 // pred_check_branch
      %10 = sbr.rel (0) target = $region5
    $region4: #{tpu_custom_call.1} parent=1 // pred_region
      _
    $region5: #{tpu_custom_call.1} parent=1 // pred_fallthru
      _
    // Predicated region
    $region6: #{tpu_custom_call.1} parent=1 // pred_check
      _
    $region7: #{tpu_custom_call.1} parent=1 // pred_check_branch
      %12 = sbr.rel (0) target = $region9
    $region8: #{tpu_custom_call.1} parent=1 // pred_region
      %14 = vsyncadd [#allocation6], 0
      %s16 = sshll.u32 %s1, 4
      %s17 = int_to_ptr.hbm [resolvable:$true] %s16
      %s18 = sshll.u32 [#allocation5], 4
      %s19 = int_to_ptr.vmem [resolvable:$true] %s18
      %21 = dma.hbm_to_vmem [thread:$0]  %s17, 64, %s19, [#allocation6]
    $region9: #{tpu_custom_call.1} parent=1 // pred_fallthru
      _
    // Predicated region
    $region10: #{tpu_custom_call.1} parent=1 // pred_check
      _
    $region11: #{tpu_custom_call.1} parent=1 // pred_check_branch
      %23 = sbr.rel (0) target = $region13
    $region12: #{tpu_custom_call.1} parent=1 // pred_region
      _
    $region13: #{tpu_custom_call.1} parent=1 // pred_fallthru
      _
    // Predicated region
    $region14: #{tpu_custom_call.1} parent=1 // pred_check
      _
    $region15: #{tpu_custom_call.1} parent=1 // pred_check_branch
      %25 = sbr.rel (0) target = $region17
    $region16: #{tpu_custom_call.1} parent=1 // pred_region
      %27 = dma.done [#allocation6], 64
    $region17: #{tpu_custom_call.1} parent=1 // pred_fallthru
      _
    %p29 = scmp.eq.s32.totalorder 0, 0
    // Predicated region
    $region18: #{tpu_custom_call.1} parent=1 // pred_check
      %p30 = pneg %p29
    $region19: #{tpu_custom_call.1} parent=1 // pred_check_branch
      %32 = sbr.rel (%p30) target = $region21
    $region20: #{tpu_custom_call.1} parent=1 // pred_region
      %v33 = vld [vmem:[%s0] sm:$0xff]
      %v34 = vmul.f32 %v33, %v33
      %35 = vadd.xlane.f32.xlu0 %v34
      %v36 = vpop.xlane.xlu0 %35
      %v37 = vmax.f32 %v36, 1e-24
      %v38 = vrsqrt.pop %v37
      %v39 = vmul.f32 %v38, %v37
      %v40 = vmul.f32 %v39, %v38
      %v41 = vmul.f32 0.5, %v40
      %v42 = vsub.f32 1.5, %v41
      %v43 = vmul.f32 %v38, %v42
      %vm44 = vweird.f32 %v37
      %vm45 = vweird.f32 %v38
      %vm46 = vmor %vm44, %vm45
      %v47 = vsel %vm46, %v38, %v43
      %v48 = vmul.f32 %v47, 20.0
      %v49 = vmul.f32 %v33, %v48
      %v50 = vpack.c.bf16 %v49, %v49
      %51 = vst [vmem:[#allocation2] sm:$0xf] %v50
      %vm52 = vcmask 7168
      %53 = vst.msk [vmem:[#allocation3] sm:$0xff] %vm52, 0.0
      %54 = vst.msk [vmem:[#allocation4] sm:$0xff] %vm52, 0.0
    $region21: #{tpu_custom_call.1} parent=1 // pred_fallthru
      _
    %v55 = vld [vmem:[#allocation2] sm:$0xf]
    %v56 = vld [vmem:[#allocation5] sm:$0xf]
    %57 = vmatpush.bf16.xpose.msra.mxu0 0
    %58 = vmatpush.bf16.xpose.msra.mxu0 0
    %59 = vmatpush.bf16.xpose.msra.mxu0 0
    %60 = vmatpush.bf16.xpose.msra.mxu0 0
    %61 = vmatpush.bf16.xpose.msra.mxu0 0
    %62 = vmatpush.bf16.xpose.msra.mxu0 0
    %63 = vmatpush.bf16.xpose.msra.mxu0 0
    %64 = vmatpush.bf16.xpose.msra.mxu0 %v56
    %65 = vmatmul.bf16.gmra.mxu0 %v55
    %v66 = vpop.f32.mrf.mxu0
    %v67 = vadd.f32 0.0, %v66
    %v68 = vpop.f32.mrf.mxu0
    %69 = vdwg.mxu0
    %s70 = smul.u32 0, 8
    %v71 = vlaneseq
    %v72 = vand.u32 %v71, 127
    %v73 = vstv %s70
    %v74 = vadd.s32 %v73, %v72
    %vm75 = vcmp.lt.s32.totalorder %v74, 8
    %v76 = vld [vmem:[%s2] sm:$0xff]
    %v77 = vld [vmem:[#allocation3] sm:$0xff]
    %v78 = vsub.f32 %v67, 20.0
    %v79 = vmul.f32 %v78, 1.442695
    %v80 = vpow.pop %v79
    %v81 = vsel %vm75, %v80, 0.0
    %vm82 = vcmask 64512
    %v83 = vsel %vm82, %v81, 0.0
    %84 = vadd.xlane.f32.xlu0 %v83
    %v85 = vpop.xlane.xlu0 %84
    %v86 = vadd.f32 %v77, %v85
    %vm87 = vcmask 7168
    %88 = vst.msk [vmem:[#allocation3] sm:$0xff] %vm87, %v86
    %v89 = vld [vmem:[#allocation4] sm:$0xff]
    %90 = vset.pattern.permute.xlu0 0
    %91 = vperm.xlu0 %90, %v76
    %v92 = vpop.permute.xlu0 %91
    %vm93 = vcmp.eq.s32.totalorder %v74, %v92
    %v94 = vsel %vm93, %v67, 0.0
    %v95 = vsel %vm82, %v94, 0.0
    %96 = vadd.xlane.f32.xlu0 %v95
    %v97 = vpop.xlane.xlu0 %96
    %v98 = vadd.f32 %v89, %v97
    %99 = vst.msk [vmem:[#allocation4] sm:$0xff] %vm87, %v98
    // Predicated region
    $region22: #{tpu_custom_call.1} parent=1 // pred_check
      %p100 = pneg %p29
    $region23: #{tpu_custom_call.1} parent=1 // pred_check_branch
      %102 = sbr.rel (%p100) target = $region25
    $region24: #{tpu_custom_call.1} parent=1 // pred_region
      %v103 = vld [vmem:[#allocation3] sm:$0xff]
      %v104 = vlog2.pop %v103
      %v105 = vmul.f32 %v104, 0.6931472
      %v106 = vadd.f32 %v105, 20.0
      %v107 = vld [vmem:[#allocation4] sm:$0xff]
      %v108 = vsub.f32 %v106, %v107
      %s109 = smul.u32 0, 8
      %v110 = vlaneseq
      %v111 = vshrl.u32 %v110, 7
      %v112 = vstv %s109
      %v113 = vadd.s32 %v112, %v111
      %vm114 = vcmp.lt.s32.totalorder %v113, 8
      %v115 = vsel %vm114, %v108, 0.0
      %116 = vst.msk [vmem:[%s3] sm:$0xff] %vm87, %v115
    $region25: #{tpu_custom_call.1} parent=1 // pred_fallthru
      _
    // Predicated region
    $region26: #{tpu_custom_call.1} parent=1 // pred_check
      _
    $region27: #{tpu_custom_call.1} parent=1 // pred_check_branch
      %118 = sbr.rel (0) target = $region29
    $region28: #{tpu_custom_call.1} parent=1 // pred_region
      _
    $region29: #{tpu_custom_call.1} parent=1 // pred_fallthru
      _
    // Predicated region
    $region30: #{tpu_custom_call.1} parent=1 // pred_check
      _
    $region31: #{tpu_custom_call.1} parent=1 // pred_check_branch
      %120 = sbr.rel (0) target = $region33
    $region32: #{tpu_custom_call.1} parent=1 // pred_region
      _
    $region33: #{tpu_custom_call.1} parent=1 // pred_fallthru
      _
    %121 = vsyncpa [#allocation6], 1

</llo_original>
